<compile_context>
chip_gen: v7x
topology: tpu7x:2x2x1
jax: 0.10.0
libtpu: 0.0.40
codegen_flags: <defaults>
</compile_context>

<pallas_src>
import functools

import jax
import jax.numpy as jnp
from jax.experimental import pallas as pl
from jax.experimental.pallas import tpu as pltpu  # noqa: F401 (TPU backend)


def _copy_kernel(x_ref, o_ref):
    # Identity copy of the single, full, lane/sublane-dense block.
    o_ref[...] = x_ref[...]


def _dense_slab_shape(total_elems, batch, per_batch):
    """Pick a lane-dense (rows, 128) slab for the copy.

    rows = total/128 (a multiple of 8 for the shapes used here), so vregs are
    fully utilized and stores are unmasked.  If 128 does not divide the total
    element count, fall back to the (batch, per_batch) block, which equals the
    full array and is therefore always a legal block shape.
    """
    if total_elems % 128 == 0:
        return (total_elems // 128, 128)
    return (batch, per_batch)


@functools.partial(jax.jit, static_argnames=("shape",))
def _view_impl(x, shape):
    b = x.shape[0]
    per_batch = 1
    for s in x.shape[1:]:
        per_batch *= s
    total = b * per_batch

    slab = _dense_slab_shape(total, b, per_batch)
    x2d = jnp.reshape(x, slab)  # metadata only

    flat = pl.pallas_call(
        _copy_kernel,
        out_shape=jax.ShapeDtypeStruct(slab, x.dtype),
        # Single full-array block, single grid step: one dense DMA in/out,
        # zero tiling / per-step pipeline overhead.
        grid=(1,),
        in_specs=[pl.BlockSpec(slab, lambda i: (0, 0))],
        out_specs=pl.BlockSpec(slab, lambda i: (0, 0)),
        # Output aliases the input buffer: no extra HBM allocation for what is
        # semantically a no-op copy.
        input_output_aliases={0: 0},
    )(x2d)

    return jnp.reshape(flat, (b,) + shape)


def pallas_view(x, *shape):
    """Equivalent of torch View(*shape): x.view(x.shape[0], *shape)."""
    b = x.shape[0]
    per_batch = 1
    for s in x.shape[1:]:
        per_batch *= s

    # Resolve a single -1 (torch .view semantics) -- static glue.
    shape = list(shape)
    if -1 in shape:
        known = 1
        for s in shape:
            if s != -1:
                known *= s
        shape[shape.index(-1)] = per_batch // known
    out_elems = 1
    for s in shape:
        out_elems *= s
    assert out_elems == per_batch, "View: incompatible shape"

    return _view_impl(x, tuple(shape))


if __name__ == "__main__":
    key = jax.random.PRNGKey(0)
    B, C, H, W = 2, 4, 16, 16
    x = jax.random.normal(key, (B, C, H, W), dtype=jnp.float32)

    # View(-1): flatten everything but the batch dim (common use of View).
    out = jax.block_until_ready(pallas_view(x, -1))
    ref = jnp.reshape(x, (B, C * H * W))
    assert out.shape == (B, C * H * W)
    assert out.dtype == x.dtype
    assert bool(jnp.all(out == ref))

    # Multi-dim target shape: View(16, 64).
    out2 = jax.block_until_ready(pallas_view(x, 16, 64))
    assert out2.shape == (B, 16, 64)
    assert bool(jnp.all(out2 == jnp.reshape(x, (B, 16, 64))))

    print("KERNEL_OK")
</pallas_src>

<mosaic_0001>
module attributes {stable_mosaic.version = 11 : i64} {
  func.func @_copy_kernel(%arg0: i32, %arg1: memref<16x128xf32, #tpu.memory_space<vmem>>, %arg2: memref<16x128xf32, #tpu.memory_space<vmem>>) attributes {dimension_semantics = [#tpu.dimension_semantics<arbitrary>], iteration_bounds = array<i64: 1>, scalar_prefetch = 0 : i64, scratch_operands = 0 : i64, tpu.core_type = #tpu.core_type<tc>, window_params = [{pipeline_mode = #tpu.pipeline_mode<synchronous>, transform_indices = @transform_0, window_bounds = array<i64: 16, 128>}, {pipeline_mode = #tpu.pipeline_mode<synchronous>, transform_indices = @transform_1, window_bounds = array<i64: 16, 128>}]} {
    %c0 = arith.constant 0 : index
    %c0_0 = arith.constant 0 : index
    %0 = vector.load %arg1[%c0, %c0_0] : memref<16x128xf32, #tpu.memory_space<vmem>>, vector<16x128xf32>
    %c0_1 = arith.constant 0 : index
    %c0_2 = arith.constant 0 : index
    %1 = vector.load %arg2[%c0_1, %c0_2] : memref<16x128xf32, #tpu.memory_space<vmem>>, vector<16x128xf32>
    tpu.vector_store %arg2[%c0_1, %c0_2], %0 {strides = array<i32>} : memref<16x128xf32, #tpu.memory_space<vmem>>, vector<16x128xf32>,
    return
  }
  func.func @transform_0(%arg0: i32) -> (i32, i32) {
    %c0_i32 = arith.constant 0 : i32
    %c0_i32_0 = arith.constant 0 : i32
    %c0_i32_1 = arith.constant 0 : i32
    return %c0_i32, %c0_i32_0 : i32, i32
  }
  func.func @transform_1(%arg0: i32) -> (i32, i32) {
    %c0_i32 = arith.constant 0 : i32
    %c0_i32_0 = arith.constant 0 : i32
    %c0_i32_1 = arith.constant 0 : i32
    return %c0_i32, %c0_i32_0 : i32, i32
  }
}

</mosaic_0001>

<llo_original>
// kernel: _view_impl.1
$region0: #{_view_impl.1}
  #allocation0 [shape = 'u32[]', space=smem, size = 0x4, offset = 0x4, fixed_abs, tag = 'smem constant byte address 0x4 - core index']
  #allocation1 [shape = 'u32[144,128]{1,0:T(1,128)}', space=vmem, size = 0x12000, scoped, tag = 'internal scratch']
  %s0 = inlined_call_operand.vmem [shape: f32[16,128], index: 0, kind: input, shape index: {}, may-alias: {0,1}]
  %s1 = inlined_call_operand.vmem [shape: f32[16,128], index: 1, kind: output, shape index: {}, may-alias: {0,1}]
  %s2 = sld [smem:[#allocation0]]
  $region14: #{_view_impl.1} parent=0
    _
  %s4 = ssub.s32 1, %s2
  %s5 = scalar_select 0, %s4, %s2
  // Predicated region
  $region2: #{_view_impl.1} parent=0 // pred_check
    _
  $region3: #{_view_impl.1} parent=0 // pred_check_branch
    %7 = sbr.rel (0) target = $region5
  $region4: #{_view_impl.1} parent=0 // pred_region
    _
  $region5: #{_view_impl.1} parent=0 // pred_fallthru
    _
  %v8 = vld [vmem:[%s0] sm:$0xff]
  %v9 = vld [vmem:[%s0 + $0x8] sm:$0xff]
  %10 = vst [vmem:[%s1] sm:$0xff] %v8
  %11 = vst [vmem:[%s1 + $0x8] sm:$0xff] %v9
  // Predicated region
  $region6: #{_view_impl.1} parent=0 // pred_check
    _
  $region7: #{_view_impl.1} parent=0 // pred_check_branch
    %13 = sbr.rel (0) target = $region9
  $region8: #{_view_impl.1} parent=0 // pred_region
    _
  $region9: #{_view_impl.1} parent=0 // pred_fallthru
    _
  // Predicated region
  $region10: #{_view_impl.1} parent=0 // pred_check
    _
  $region11: #{_view_impl.1} parent=0 // pred_check_branch
    %15 = sbr.rel (0) target = $region13
  $region12: #{_view_impl.1} parent=0 // pred_region
    _
  $region13: #{_view_impl.1} parent=0 // pred_fallthru
    _

</llo_original>
